<compile_context>
chip_gen: v5e
topology: v5e:2x2
jax: 0.10.0
libtpu: 0.0.40
codegen_flags: <defaults>
</compile_context>

<pallas_src>
import math

import jax
import jax.numpy as jnp
from jax.experimental import pallas as pl
from jax.experimental.pallas import tpu as pltpu


def _round_up(x: int, m: int) -> int:
    return ((x + m - 1) // m) * m


def _kernel_split(freqs_ref, t_ref, out_ref):
    # Path A (half_dim % 128 == 0): two lane-aligned, unmasked stores; one
    # transcendental per output element.
    #   freqs_ref: (1, half_dim) f32, t_ref: (tr, 1) f32, out_ref: (tr, dim)
    half = freqs_ref.shape[1]
    arg = t_ref[...] * freqs_ref[...]                     # (tr, half), VPU only
    out_ref[:, :half] = jnp.sin(arg).astype(out_ref.dtype)
    out_ref[:, half:] = jnp.cos(arg).astype(out_ref.dtype)


def _kernel_folded(freq_row_ref, sel_row_ref, t_ref, out_ref):
    # Path B: g batch rows folded into the lane axis; one full-width store.
    #   freq_row_ref: (1, W) f32   = tile([f | f], g)
    #   sel_row_ref : (1, W) f32   = tile([1]*half + [0]*half, g)
    #   t_ref       : (tr, g) f32  (g consecutive timesteps per output row)
    #   out_ref     : (tr, W)      W = g * dim
    tr, g = t_ref.shape
    W = out_ref.shape[1]
    dim = W // g

    if g == 1:
        t_wide = t_ref[...]                               # (tr, 1) broadcasts
    else:
        # Expand t: lane l gets t column l // dim.  Small static where-chain
        # (g <= 8) on the otherwise-idle VPU; no XLU relayout, no extra HBM.
        lane = jax.lax.broadcasted_iota(jnp.int32, (1, W), 1)
        t_wide = t_ref[:, 0:1]
        for j in range(1, g):
            t_wide = jnp.where(lane >= j * dim, t_ref[:, j:j + 1], t_wide)

    arg = t_wide * freq_row_ref[...]                      # (tr, W)
    emb = jnp.where(sel_row_ref[...] != 0.0, jnp.sin(arg), jnp.cos(arg))
    out_ref[...] = emb.astype(out_ref.dtype)


def sinusoidal_pos_emb(
    t: jax.Array,
    dim: int,
    *,
    tile_rows: int = 2048,
    max_fold: int = 8,
    out_dtype=jnp.float32,
    tile_bytes_target: int = 4 * 1024 * 1024,
) -> jax.Array:
    """JAX/Pallas equivalent of SinusoidalPosEmb(dim)(t).

    Tiles are sized by a ~4 MiB per-output-buffer budget (double-buffered), so
    the kernel fits every generation's scoped-VMEM default (incl. v5e's 16 MiB)
    without touching vmem_limit_bytes; no need to shrink tiles on v7x.
    """
    assert t.ndim == 1, "t is expected to be a 1-D tensor of timesteps"
    assert dim % 2 == 0 and dim >= 4, "dim must be even and >= 4"

    B = t.shape[0]
    half_dim = dim // 2

    # Frequencies are a static function of `dim`; compute once in the wrapper.
    scale = math.log(10000.0) / (half_dim - 1)
    freqs = jnp.exp(jnp.arange(half_dim, dtype=jnp.float32) * (-scale))
    t_f = t.astype(jnp.float32)

    # ---- choose layout -------------------------------------------------
    path_a = (half_dim % 128 == 0)
    if path_a:
        g = 1
    else:
        g = 128 // math.gcd(dim, 128)      # smallest g with (g*dim) % 128 == 0
        if g > max_fold or B % g != 0:
            # TODO(synk): pad B to a multiple of g (and slice after) instead of
            # falling back to lane-masked stores for awkward (B, dim) combos.
            g = 1
    W = g * dim
    R = B // g if B % g == 0 else B        # rows of the (R, W) output view

    # ---- tile size -----------------------------------------------------
    vmem_rows = max(8, ((tile_bytes_target // (W * 4)) // 8) * 8)
    tr = min(tile_rows, vmem_rows, _round_up(R, 8))
    if R > 8:
        # guarantee >= 2 grid steps so both v7x TensorCores get work
        tr = min(tr, _round_up(pl.cdiv(R, 2), 8))
    tr = max(tr, 8)
    grid = (pl.cdiv(R, tr),)

    compiler_params = pltpu.CompilerParams(dimension_semantics=("parallel",))

    if path_a:
        freqs_row = freqs.reshape(1, half_dim)
        t2d = t_f.reshape(B, 1)
        return pl.pallas_call(
            _kernel_split,
            out_shape=jax.ShapeDtypeStruct((B, dim), out_dtype),
            grid=grid,
            in_specs=[
                pl.BlockSpec((1, half_dim), lambda i: (0, 0)),  # resident
                pl.BlockSpec((tr, 1), lambda i: (i, 0)),
            ],
            out_specs=pl.BlockSpec((tr, dim), lambda i: (i, 0)),
            compiler_params=compiler_params,
        )(freqs_row, t2d)

    # Path B: lane patterns for one W-wide output row.
    pat = jnp.concatenate([freqs, freqs]).reshape(1, dim)
    freq_row = jnp.tile(pat, (1, g))                       # (1, W)
    sel = jnp.concatenate(
        [jnp.ones((half_dim,), jnp.float32), jnp.zeros((half_dim,), jnp.float32)]
    ).reshape(1, dim)
    sel_row = jnp.tile(sel, (1, g))                        # (1, W)
    t2d = t_f.reshape(R, g)

    out = pl.pallas_call(
        _kernel_folded,
        out_shape=jax.ShapeDtypeStruct((R, W), out_dtype),
        grid=grid,
        in_specs=[
            pl.BlockSpec((1, W), lambda i: (0, 0)),        # resident
            pl.BlockSpec((1, W), lambda i: (0, 0)),        # resident
            pl.BlockSpec((tr, g), lambda i: (i, 0)),
        ],
        out_specs=pl.BlockSpec((tr, W), lambda i: (i, 0)),
        compiler_params=compiler_params,
    )(freq_row, sel_row, t2d)
    # Row-major (R, W) is the same flat buffer as (B, dim): free reshape.
    return out.reshape(B, dim)


def _reference(t: jax.Array, dim: int) -> jax.Array:
    half_dim = dim // 2
    emb = math.log(10000.0) / (half_dim - 1)
    emb = jnp.exp(jnp.arange(half_dim, dtype=jnp.float32) * -emb)
    emb = t.astype(jnp.float32)[:, None] * emb[None, :]
    return jnp.concatenate([jnp.sin(emb), jnp.cos(emb)], axis=-1)


if __name__ == "__main__":
    key = jax.random.PRNGKey(0)

    cases = [
        (8, 32),    # folded path: g=4, W=128 (lane-dense, typical diffusion dim)
        (4, 256),   # split path: half_dim=128, both stores lane-aligned
        (6, 40),    # fallback path: fold factor too large -> g=1 (masked store)
        (44, 64),   # folded + multiple grid tiles with a partial last tile
    ]

    for idx, (B, dim) in enumerate(cases):
        k = jax.random.fold_in(key, idx)
        t = jax.random.uniform(k, (B,), dtype=jnp.float32, minval=0.0,
                               maxval=1000.0)
        out = sinusoidal_pos_emb(t, dim)
        out = jax.block_until_ready(out)
        ref = _reference(t, dim)
        assert out.shape == (B, dim), (out.shape, (B, dim))
        assert out.dtype == jnp.float32, out.dtype
        assert jnp.allclose(out, ref, atol=1e-5, rtol=1e-5), (
            (B, dim), float(jnp.max(jnp.abs(out - ref))))

    print("KERNEL_OK")
</pallas_src>

<mosaic_0001>
module attributes {stable_mosaic.version = 11 : i64} {
  func.func @_kernel_folded(%arg0: i32, %arg1: memref<1x128xf32, #tpu.memory_space<vmem>>, %arg2: memref<1x128xf32, #tpu.memory_space<vmem>>, %arg3: memref<8x4xf32, #tpu.memory_space<vmem>>, %arg4: memref<8x128xf32, #tpu.memory_space<vmem>>) attributes {dimension_semantics = [#tpu.dimension_semantics<parallel>], iteration_bounds = array<i64: 1>, scalar_prefetch = 0 : i64, scratch_operands = 0 : i64, tpu.core_type = #tpu.core_type<tc>, window_params = [{pipeline_mode = #tpu.pipeline_mode<synchronous>, transform_indices = @transform_0, window_bounds = array<i64: 1, 128>}, {pipeline_mode = #tpu.pipeline_mode<synchronous>, transform_indices = @transform_1, window_bounds = array<i64: 1, 128>}, {transform_indices = @transform_2, window_bounds = array<i64: 8, 4>}, {transform_indices = @transform_3, window_bounds = array<i64: 8, 128>}]} {
    %0 = tpu.iota {dimensions = array<i32: 1>} : vector<1x128xi32>
    %c0 = arith.constant 0 : index
    %c0_0 = arith.constant 0 : index
    %1 = vector.load %arg3[%c0, %c0_0] : memref<8x4xf32, #tpu.memory_space<vmem>>, vector<8x1xf32>
    %c32_i32 = arith.constant 32 : i32
    %2 = vector.broadcast %c32_i32 : i32 to vector<1x128xi32>
    %3 = arith.cmpi sge, %0, %2 : vector<1x128xi32>
    %c0_1 = arith.constant 0 : index
    %c1 = arith.constant 1 : index
    %4 = vector.load %arg3[%c0_1, %c1] : memref<8x4xf32, #tpu.memory_space<vmem>>, vector<8x1xf32>
    %5 = vector.shape_cast %3 : vector<1x128xi1> to vector<1x128xi1>
    %6 = vector.broadcast %5 : vector<1x128xi1> to vector<8x128xi1>
    %7 = vector.shape_cast %4 : vector<8x1xf32> to vector<8x1xf32>
    %8 = vector.broadcast %7 : vector<8x1xf32> to vector<8x128xf32>
    %9 = vector.shape_cast %1 : vector<8x1xf32> to vector<8x1xf32>
    %10 = vector.broadcast %9 : vector<8x1xf32> to vector<8x128xf32>
    %11 = arith.select %6, %8, %10 : vector<8x128xi1>, vector<8x128xf32>
    %c64_i32 = arith.constant 64 : i32
    %12 = vector.broadcast %c64_i32 : i32 to vector<1x128xi32>
    %13 = arith.cmpi sge, %0, %12 : vector<1x128xi32>
    %c0_2 = arith.constant 0 : index
    %c2 = arith.constant 2 : index
    %14 = vector.load %arg3[%c0_2, %c2] : memref<8x4xf32, #tpu.memory_space<vmem>>, vector<8x1xf32>
    %15 = vector.shape_cast %13 : vector<1x128xi1> to vector<1x128xi1>
    %16 = vector.broadcast %15 : vector<1x128xi1> to vector<8x128xi1>
    %17 = vector.shape_cast %14 : vector<8x1xf32> to vector<8x1xf32>
    %18 = vector.broadcast %17 : vector<8x1xf32> to vector<8x128xf32>
    %19 = arith.select %16, %18, %11 : vector<8x128xi1>, vector<8x128xf32>
    %c96_i32 = arith.constant 96 : i32
    %20 = vector.broadcast %c96_i32 : i32 to vector<1x128xi32>
    %21 = arith.cmpi sge, %0, %20 : vector<1x128xi32>
    %c0_3 = arith.constant 0 : index
    %c3 = arith.constant 3 : index
    %22 = vector.load %arg3[%c0_3, %c3] : memref<8x4xf32, #tpu.memory_space<vmem>>, vector<8x1xf32>
    %23 = vector.shape_cast %21 : vector<1x128xi1> to vector<1x128xi1>
    %24 = vector.broadcast %23 : vector<1x128xi1> to vector<8x128xi1>
    %25 = vector.shape_cast %22 : vector<8x1xf32> to vector<8x1xf32>
    %26 = vector.broadcast %25 : vector<8x1xf32> to vector<8x128xf32>
    %27 = arith.select %24, %26, %19 : vector<8x128xi1>, vector<8x128xf32>
    %c0_4 = arith.constant 0 : index
    %c0_5 = arith.constant 0 : index
    %28 = vector.load %arg1[%c0_4, %c0_5] : memref<1x128xf32, #tpu.memory_space<vmem>>, vector<1x128xf32>
    %29 = vector.broadcast %28 : vector<1x128xf32> to vector<8x128xf32>
    %30 = arith.mulf %27, %29 : vector<8x128xf32>
    %c0_6 = arith.constant 0 : index
    %c0_7 = arith.constant 0 : index
    %31 = vector.load %arg2[%c0_6, %c0_7] : memref<1x128xf32, #tpu.memory_space<vmem>>, vector<1x128xf32>
    %cst = arith.constant 0.000000e+00 : f32
    %32 = vector.broadcast %cst : f32 to vector<1x128xf32>
    %33 = arith.cmpf one, %31, %32 : vector<1x128xf32>
    %34 = math.sin %30 : vector<8x128xf32>
    %35 = math.cos %30 : vector<8x128xf32>
    %36 = vector.shape_cast %33 : vector<1x128xi1> to vector<1x128xi1>
    %37 = vector.broadcast %36 : vector<1x128xi1> to vector<8x128xi1>
    %38 = arith.select %37, %34, %35 : vector<8x128xi1>, vector<8x128xf32>
    %c0_8 = arith.constant 0 : index
    %c0_9 = arith.constant 0 : index
    %39 = vector.load %arg4[%c0_8, %c0_9] : memref<8x128xf32, #tpu.memory_space<vmem>>, vector<8x128xf32>
    tpu.vector_store %arg4[%c0_8, %c0_9], %38 {strides = array<i32>} : memref<8x128xf32, #tpu.memory_space<vmem>>, vector<8x128xf32>,
    return
  }
  func.func @transform_0(%arg0: i32) -> (i32, i32) {
    %c0_i32 = arith.constant 0 : i32
    %c0_i32_0 = arith.constant 0 : i32
    %c0_i32_1 = arith.constant 0 : i32
    return %c0_i32, %c0_i32_0 : i32, i32
  }
  func.func @transform_1(%arg0: i32) -> (i32, i32) {
    %c0_i32 = arith.constant 0 : i32
    %c0_i32_0 = arith.constant 0 : i32
    %c0_i32_1 = arith.constant 0 : i32
    return %c0_i32, %c0_i32_0 : i32, i32
  }
  func.func @transform_2(%arg0: i32) -> (i32, i32) {
    %c0_i32 = arith.constant 0 : i32
    %c0_i32_0 = arith.constant 0 : i32
    return %arg0, %c0_i32 : i32, i32
  }
  func.func @transform_3(%arg0: i32) -> (i32, i32) {
    %c0_i32 = arith.constant 0 : i32
    %c0_i32_0 = arith.constant 0 : i32
    return %arg0, %c0_i32 : i32, i32
  }
}

</mosaic_0001>

<llo_original>
// kernel: tpu_custom_call.1
$region0: #{tpu_custom_call.1}
  #allocation0 [shape = 'u32[]', space=smem, size = 0x4, offset = 0x4, fixed_abs, tag = 'smem constant byte address 0x4 - core index']
  #allocation1 [shape = 'u32[72,128]{1,0:T(1,128)}', space=vmem, size = 0x9000, scoped, tag = 'internal scratch']
  %s0 = inlined_call_operand.hbm [shape: f32[1,128], index: 0, kind: input, shape index: {}]
  %s1 = inlined_call_operand.hbm [shape: f32[1,128], index: 1, kind: input, shape index: {}]
  %s2 = inlined_call_operand.hbm [shape: f32[2,4], index: 2, kind: input, shape index: {}]
  %s3 = inlined_call_operand.hbm [shape: f32[2,128], index: 3, kind: output, shape index: {}]
  %s4 = sld [smem:[#allocation0]]
  $region34: #{tpu_custom_call.1} parent=0
    _
  %s6 = ssub.s32 1, %s4
  %s7 = scalar_select 0, %s6, %s4
  $region1: #{tpu_custom_call.1} parent=0
    #allocation2 [shape = 'u8[512]{0}', space=vmem, size = 0x400, scoped, tag = 'input window, operand 0, single buffered']
    #allocation3 [shape = 's32[1]{0}', space=sflag, size = 0x4, scoped, tag = 'scoped memory for tpu_custom_call.1']
    #allocation4 [shape = 's32[1]{0}', space=sflag, size = 0x4, scoped, tag = 'scoped memory for tpu_custom_call.1']
    #allocation5 [shape = 'u8[512]{0}', space=vmem, size = 0x400, scoped, tag = 'input window, operand 1, single buffered']
    #allocation6 [shape = 's32[1]{0}', space=sflag, size = 0x4, scoped, tag = 'scoped memory for tpu_custom_call.1']
    #allocation7 [shape = 'u8[4096]{0}', space=vmem, size = 0x1000, scoped, tag = 'input window, operand 2, single buffered']
    #allocation8 [shape = 'u8[4096]{0}', space=vmem, size = 0x1000, scoped, tag = 'output window, operand 0, single buffered']
    %8 = vsyncpa [#allocation3], 0
    %9 = vsyncpa [#allocation6], 0
    %10 = vsyncpa [#allocation4], 0
    // Predicated region
    $region2: #{tpu_custom_call.1} parent=1 // pred_check
      _
    $region3: #{tpu_custom_call.1} parent=1 // pred_check_branch
      %12 = sbr.rel (0) target = $region5
    $region4: #{tpu_custom_call.1} parent=1 // pred_region
      %14 = vsyncadd [#allocation3], 0
      %s16 = sshll.u32 %s0, 4
      %s17 = int_to_ptr.hbm [resolvable:$true] %s16
      %s18 = sshll.u32 [#allocation2], 4
      %s19 = int_to_ptr.vmem [resolvable:$true] %s18
      %21 = dma.hbm_to_vmem [thread:$0]  %s17, 16, %s19, [#allocation3]
    $region5: #{tpu_custom_call.1} parent=1 // pred_fallthru
      _
    // Predicated region
    $region6: #{tpu_custom_call.1} parent=1 // pred_check
      _
    $region7: #{tpu_custom_call.1} parent=1 // pred_check_branch
      %23 = sbr.rel (0) target = $region9
    $region8: #{tpu_custom_call.1} parent=1 // pred_region
      %25 = vsyncadd [#allocation6], 0
      %s27 = sshll.u32 %s1, 4
      %s28 = int_to_ptr.hbm [resolvable:$true] %s27
      %s29 = sshll.u32 [#allocation5], 4
      %s30 = int_to_ptr.vmem [resolvable:$true] %s29
      %32 = dma.hbm_to_vmem [thread:$0]  %s28, 16, %s30, [#allocation6]
    $region9: #{tpu_custom_call.1} parent=1 // pred_fallthru
      _
    // Predicated region
    $region10: #{tpu_custom_call.1} parent=1 // pred_check
      _
    $region11: #{tpu_custom_call.1} parent=1 // pred_check_branch
      %34 = sbr.rel (0) target = $region13
    $region12: #{tpu_custom_call.1} parent=1 // pred_region
      %36 = vsyncadd [#allocation6], 96
      %s37 = sshll.u32 %s2, 4
      %s38 = int_to_ptr.hbm [resolvable:$true] %s37
      %s39 = sshll.u32 [#allocation7], 4
      %s40 = int_to_ptr.vmem [resolvable:$true] %s39
      %45 = dma.hbm_to_vmem [thread:$0]  %s38, 32, %s40, [#allocation6], 32, 32, 2
    $region13: #{tpu_custom_call.1} parent=1 // pred_fallthru
      _
    // Predicated region
    $region14: #{tpu_custom_call.1} parent=1 // pred_check
      _
    $region15: #{tpu_custom_call.1} parent=1 // pred_check_branch
      %47 = sbr.rel (0) target = $region17
    $region16: #{tpu_custom_call.1} parent=1 // pred_region
      %49 = dma.done [#allocation3], 16
    $region17: #{tpu_custom_call.1} parent=1 // pred_fallthru
      _
    // Predicated region
    $region18: #{tpu_custom_call.1} parent=1 // pred_check
      _
    $region19: #{tpu_custom_call.1} parent=1 // pred_check_branch
      %51 = sbr.rel (0) target = $region21
    $region20: #{tpu_custom_call.1} parent=1 // pred_region
      %53 = dma.done [#allocation6], 16
    $region21: #{tpu_custom_call.1} parent=1 // pred_fallthru
      _
    // Predicated region
    $region22: #{tpu_custom_call.1} parent=1 // pred_check
      _
    $region23: #{tpu_custom_call.1} parent=1 // pred_check_branch
      %55 = sbr.rel (0) target = $region25
    $region24: #{tpu_custom_call.1} parent=1 // pred_region
      %57 = dma.done [#allocation6], 128
    $region25: #{tpu_custom_call.1} parent=1 // pred_fallthru
      _
    %v58 = vlaneseq
    %v59 = vand.u32 %v58, 127
    %v60 = vld [vmem:[#allocation7] sm:$0xff]
    %vm61 = vcmp.ge.s32.totalorder %v59, 32
    %v62 = vsel %vm61, 1, 0
    %vm63 = vcmp.eq.s32.totalorder %v62, 1
    %65 = vset.pattern.permute.xlu0 1
    %66 = vperm.xlu0 %65, %v60
    %v67 = vpop.permute.xlu0 %66
    %69 = vset.pattern.permute.xlu0 0
    %70 = vperm.xlu0 %69, %v60
    %v71 = vpop.permute.xlu0 %70
    %v73 = vsel %vm63, %v67, %v71
    %vm74 = vcmp.ge.s32.totalorder %v59, 64
    %v75 = vsel %vm74, 1, 0
    %vm76 = vcmp.eq.s32.totalorder %v75, 1
    %77 = vset.pattern.permute.xlu0 2
    %78 = vperm.xlu0 %77, %v60
    %v79 = vpop.permute.xlu0 %78
    %v81 = vsel %vm76, %v79, %v73
    %vm82 = vcmp.ge.s32.totalorder %v59, 96
    %v83 = vsel %vm82, 1, 0
    %vm84 = vcmp.eq.s32.totalorder %v83, 1
    %85 = vset.pattern.permute.xlu0 3
    %86 = vperm.xlu0 %85, %v60
    %v87 = vpop.permute.xlu0 %86
    %v89 = vsel %vm84, %v87, %v81
    %v90 = vld [vmem:[#allocation2] sm:$0x1]
    %v92 = vperm.slane %v90, 0
    %v94 = vmul.f32 %v89, %v92
    %v95 = vld [vmem:[#allocation5] sm:$0x1]
    %vm96 = vcmp.ne.f32.partialorder %v95, 0.0
    %v97 = vand.u32 2147483647, %v94
    %vm98 = vcmp.le.f32.partialorder %v97, 0.7853982
    %vm99 = vcmp.lt.s32.totalorder %v94, 0
    %v100 = vand.u32 %v94, 2139095040
    %v101 = vshrl.u32 %v100, 23
    %v102 = vsub.s32 %v101, 127
    %v103 = vand.u32 2147483647, %v94
    %v104 = vand.u32 %v103, 8388607
    %v105 = vor.u32 %v104, 8388608
    %v106 = vsub.s32 0, %v105
    %v107 = vadd.s32 %v102, 1
    %vm108 = vcmp.gt.s32.totalorder %v107, 0
    %v109 = vsel %vm108, %v107, 0
    %v110 = vshrl.u32 %v109, 5
    %v111 = vand.u32 %v109, 31
    %v112 = vsub.s32 32, %v111
    %v113 = vshrl.u32 683565275, %v112
    %v114 = vshll.u32 683565275, %v111
    %v115 = vshrl.u32 2475754826, %v112
    %v116 = vor.u32 %v114, %v115
    %v117 = vshll.u32 2475754826, %v111
    %v118 = vshrl.u32 2131351028, %v112
    %v119 = vor.u32 %v117, %v118
    %v120 = vshll.u32 2131351028, %v111
    %v121 = vshrl.u32 2102212464, %v112
    %v122 = vor.u32 %v120, %v121
    %v123 = vshll.u32 2102212464, %v111
    %v124 = vshrl.u32 920167782, %v112
    %v125 = vor.u32 %v123, %v124
    %v126 = vshll.u32 920167782, %v111
    %v127 = vshrl.u32 1326507024, %v112
    %v128 = vor.u32 %v126, %v127
    %vm129 = vcmp.lt.s32.totalorder %v110, 1
    %vm130 = vcmp.lt.s32.totalorder %v110, 2
    %vm131 = vcmp.lt.s32.totalorder %v110, 3
    %vm132 = vcmp.lt.s32.totalorder %v110, 4
    %v133 = vsel %vm129, %v113, %v116
    %v134 = vsel %vm132, %v122, 2102212464
    %v135 = vsel %vm131, %v119, %v134
    %v136 = vsel %vm130, %v133, %v135
    %v137 = vsel %vm129, %v116, %v119
    %v138 = vsel %vm132, %v125, 920167782
    %v139 = vsel %vm131, %v122, %v138
    %v140 = vsel %vm130, %v137, %v139
    %v141 = vsel %vm129, %v119, %v122
    %v142 = vsel %vm132, %v128, 1326507024
    %v143 = vsel %vm131, %v125, %v142
    %v144 = vsel %vm130, %v141, %v143
    %v145 = vshll.u32 %v105, 8
    %v146 = vand.u32 %v145, 65535
    %v147 = vshrl.u32 %v145, 16
    %v148 = vand.u32 %v144, 65535
    %v149 = vshrl.u32 %v144, 16
    %v150 = vmul.u32 %v146, %v148
    %v151 = vmul.u32 %v146, %v149
    %v152 = vmul.u32 %v147, %v148
    %v153 = vmul.u32 %v147, %v149
    %v154 = vshll.u32 %v151, 16
    %v155 = vshrl.u32 %v151, 16
    %v156 = vshll.u32 %v152, 16
    %v157 = vshrl.u32 %v152, 16
    %vm158 = vc.u32 %v150, %v154
    %v159 = vsel %vm158, 1, 0
    %v160 = vadd.s32 %v150, %v154
    %v161 = vadd.s32 %v153, %v159
    %vm162 = vc.u32 %v160, %v156
    %v163 = vsel %vm162, 1, 0
    %v164 = vadd.s32 %v160, %v156
    %v165 = vadd.s32 %v161, %v163
    %v166 = vadd.s32 %v165, %v155
    %v167 = vadd.s32 %v166, %v157
    %v168 = vand.u32 %v145, 65535
    %v169 = vshrl.u32 %v145, 16
    %v170 = vand.u32 %v140, 65535
    %v171 = vshrl.u32 %v140, 16
    %v172 = vmul.u32 %v168, %v170
    %v173 = vmul.u32 %v168, %v171
    %v174 = vmul.u32 %v169, %v170
    %v175 = vmul.u32 %v169, %v171
    %v176 = vshll.u32 %v173, 16
    %v177 = vshrl.u32 %v173, 16
    %v178 = vshll.u32 %v174, 16
    %v179 = vshrl.u32 %v174, 16
    %vm180 = vc.u32 %v172, %v176
    %v181 = vsel %vm180, 1, 0
    %v182 = vadd.s32 %v172, %v176
    %v183 = vadd.s32 %v175, %v181
    %vm184 = vc.u32 %v182, %v178
    %v185 = vsel %vm184, 1, 0
    %v186 = vadd.s32 %v182, %v178
    %v187 = vadd.s32 %v183, %v185
    %v188 = vadd.s32 %v187, %v177
    %v189 = vadd.s32 %v188, %v179
    %v190 = vmul.u32 %v145, %v136
    %v191 = vadd.s32 %v167, %v186
    %vm192 = vc.u32 %v167, %v186
    %v193 = vadd.s32 %v189, 1
    %v194 = vsel %vm192, %v193, %v189
    %v195 = vadd.s32 %v190, %v194
    %v196 = vadd.s32 %v195, 536870912
    %v197 = vshrl.u32 %v196, 30
    %v198 = vshll.u32 %v197, 30
    %v199 = vsub.s32 %v195, %v198
    %vm200 = vcmp.lt.s32.totalorder %v199, 0
    %v201 = vsub.s32 0, %v199
    %v202 = vsel %vm200, %v201, %v199
    %v203 = vclz %v202
    %v204 = vsub.s32 %v203, 2
    %vm205 = vcmp.gt.s32.totalorder 0, %v204
    %v206 = vsel %vm205, 0, %v204
    %v207 = vsub.s32 32, %v206
    %v208 = vshll.u32 %v199, %v206
    %v209 = vshrl.u32 %v191, %v207
    %v210 = vor.u32 %v208, %v209
    %v211 = vsub.s32 4294967266, %v206
    %v212 = vadd.s32 %v211, 127
    %v213 = vshll.u32 %v212, 23
    %v214 = vor.u32 4788187, %v213
    %v215 = vand.u32 2147483647, %v214
    %v217 = vcvt.s32.f32 %v210
    %v218 = vmul.f32 %v217, %v215
    %v219 = vxor.u32 %v218, 2147483648
    %v220 = vsel %vm99, %v219, %v218
    %v221 = vsub.s32 4, %v197
    %v222 = vsel %vm99, %v221, %v197
    %v223 = vsel %vm98, %v94, %v220
    %v224 = vsel %vm98, 0, %v222
    %v225 = vmul.f32 %v223, %v223
    %v226 = vmul.f32 %v225, -0.001358992
    %v227 = vadd.f32 %v226, 0.041655596
    %v228 = vmul.f32 %v225, %v227
    %v229 = vadd.f32 %v228, -0.4999988
    %v230 = vmul.f32 %v225, %v229
    %v231 = vadd.f32 1.0, %v230
    %v232 = vmul.f32 %v223, %v223
    %v233 = vmul.f32 %v232, -0.00019511016
    %v234 = vadd.f32 %v233, 0.008332121
    %v235 = vmul.f32 %v232, %v234
    %v236 = vadd.f32 %v235, -0.16666654
    %v237 = vmul.f32 %v232, %v236
    %v238 = vadd.f32 %v237, 1.0
    %v239 = vmul.f32 %v238, %v223
    %vm240 = vweird.f32 %v94
    %v241 = vadd.s32 %v224, 3
    %v242 = vand.u32 %v241, 3
    %vm243 = vcmp.lt.s32.totalorder %v242, 2
    %vm244 = vcmp.eq.s32.totalorder %v242, 0
    %v245 = vxor.u32 %v239, 2147483648
    %v246 = vsel %vm244, %v231, %v245
    %vm247 = vcmp.eq.s32.totalorder %v242, 2
    %v248 = vxor.u32 %v231, 2147483648
    %v249 = vsel %vm247, %v248, %v239
    %v250 = vsel %vm243, %v246, %v249
    %v251 = vsel %vm240, nan, %v250
    %v252 = vand.u32 2147483647, %v94
    %vm253 = vcmp.le.f32.partialorder %v252, 0.7853982
    %vm254 = vcmp.lt.s32.totalorder %v94, 0
    %v255 = vand.u32 %v94, 2139095040
    %v256 = vshrl.u32 %v255, 23
    %v257 = vsub.s32 %v256, 127
    %v258 = vand.u32 2147483647, %v94
    %v259 = vand.u32 %v258, 8388607
    %v260 = vor.u32 %v259, 8388608
    %v261 = vsub.s32 0, %v260
    %v262 = vadd.s32 %v257, 1
    %vm263 = vcmp.gt.s32.totalorder %v262, 0
    %v264 = vsel %vm263, %v262, 0
    %v265 = vshrl.u32 %v264, 5
    %v266 = vand.u32 %v264, 31
    %v267 = vsub.s32 32, %v266
    %v268 = vshrl.u32 683565275, %v267
    %v269 = vshll.u32 683565275, %v266
    %v270 = vshrl.u32 2475754826, %v267
    %v271 = vor.u32 %v269, %v270
    %v272 = vshll.u32 2475754826, %v266
    %v273 = vshrl.u32 2131351028, %v267
    %v274 = vor.u32 %v272, %v273
    %v275 = vshll.u32 2131351028, %v266
    %v276 = vshrl.u32 2102212464, %v267
    %v277 = vor.u32 %v275, %v276
    %v278 = vshll.u32 2102212464, %v266
    %v279 = vshrl.u32 920167782, %v267
    %v280 = vor.u32 %v278, %v279
    %v281 = vshll.u32 920167782, %v266
    %v282 = vshrl.u32 1326507024, %v267
    %v283 = vor.u32 %v281, %v282
    %vm284 = vcmp.lt.s32.totalorder %v265, 1
    %vm285 = vcmp.lt.s32.totalorder %v265, 2
    %vm286 = vcmp.lt.s32.totalorder %v265, 3
    %vm287 = vcmp.lt.s32.totalorder %v265, 4
    %v288 = vsel %vm284, %v268, %v271
    %v289 = vsel %vm287, %v277, 2102212464
    %v290 = vsel %vm286, %v274, %v289
    %v291 = vsel %vm285, %v288, %v290
    %v292 = vsel %vm284, %v271, %v274
    %v293 = vsel %vm287, %v280, 920167782
    %v294 = vsel %vm286, %v277, %v293
    %v295 = vsel %vm285, %v292, %v294
    %v296 = vsel %vm284, %v274, %v277
    %v297 = vsel %vm287, %v283, 1326507024
    %v298 = vsel %vm286, %v280, %v297
    %v299 = vsel %vm285, %v296, %v298
    %v300 = vshll.u32 %v260, 8
    %v301 = vand.u32 %v300, 65535
    %v302 = vshrl.u32 %v300, 16
    %v303 = vand.u32 %v299, 65535
    %v304 = vshrl.u32 %v299, 16
    %v305 = vmul.u32 %v301, %v303
    %v306 = vmul.u32 %v301, %v304
    %v307 = vmul.u32 %v302, %v303
    %v308 = vmul.u32 %v302, %v304
    %v309 = vshll.u32 %v306, 16
    %v310 = vshrl.u32 %v306, 16
    %v311 = vshll.u32 %v307, 16
    %v312 = vshrl.u32 %v307, 16
    %vm313 = vc.u32 %v305, %v309
    %v314 = vsel %vm313, 1, 0
    %v315 = vadd.s32 %v305, %v309
    %v316 = vadd.s32 %v308, %v314
    %vm317 = vc.u32 %v315, %v311
    %v318 = vsel %vm317, 1, 0
    %v319 = vadd.s32 %v315, %v311
    %v320 = vadd.s32 %v316, %v318
    %v321 = vadd.s32 %v320, %v310
    %v322 = vadd.s32 %v321, %v312
    %v323 = vand.u32 %v300, 65535
    %v324 = vshrl.u32 %v300, 16
    %v325 = vand.u32 %v295, 65535
    %v326 = vshrl.u32 %v295, 16
    %v327 = vmul.u32 %v323, %v325
    %v328 = vmul.u32 %v323, %v326
    %v329 = vmul.u32 %v324, %v325
    %v330 = vmul.u32 %v324, %v326
    %v331 = vshll.u32 %v328, 16
    %v332 = vshrl.u32 %v328, 16
    %v333 = vshll.u32 %v329, 16
    %v334 = vshrl.u32 %v329, 16
    %vm335 = vc.u32 %v327, %v331
    %v336 = vsel %vm335, 1, 0
    %v337 = vadd.s32 %v327, %v331
    %v338 = vadd.s32 %v330, %v336
    %vm339 = vc.u32 %v337, %v333
    %v340 = vsel %vm339, 1, 0
    %v341 = vadd.s32 %v337, %v333
    %v342 = vadd.s32 %v338, %v340
    %v343 = vadd.s32 %v342, %v332
    %v344 = vadd.s32 %v343, %v334
    %v345 = vmul.u32 %v300, %v291
    %v346 = vadd.s32 %v322, %v341
    %vm347 = vc.u32 %v322, %v341
    %v348 = vadd.s32 %v344, 1
    %v349 = vsel %vm347, %v348, %v344
    %v350 = vadd.s32 %v345, %v349
    %v351 = vadd.s32 %v350, 536870912
    %v352 = vshrl.u32 %v351, 30
    %v353 = vshll.u32 %v352, 30
    %v354 = vsub.s32 %v350, %v353
    %vm355 = vcmp.lt.s32.totalorder %v354, 0
    %v356 = vsub.s32 0, %v354
    %v357 = vsel %vm355, %v356, %v354
    %v358 = vclz %v357
    %v359 = vsub.s32 %v358, 2
    %vm360 = vcmp.gt.s32.totalorder 0, %v359
    %v361 = vsel %vm360, 0, %v359
    %v362 = vsub.s32 32, %v361
    %v363 = vshll.u32 %v354, %v361
    %v364 = vshrl.u32 %v346, %v362
    %v365 = vor.u32 %v363, %v364
    %v366 = vsub.s32 4294967266, %v361
    %v367 = vadd.s32 %v366, 127
    %v368 = vshll.u32 %v367, 23
    %v369 = vor.u32 4788187, %v368
    %v370 = vand.u32 2147483647, %v369
    %v372 = vcvt.s32.f32 %v365
    %v373 = vmul.f32 %v372, %v370
    %v374 = vxor.u32 %v373, 2147483648
    %v375 = vsel %vm254, %v374, %v373
    %v376 = vsub.s32 4, %v352
    %v377 = vsel %vm254, %v376, %v352
    %v378 = vsel %vm253, %v94, %v375
    %v379 = vsel %vm253, 0, %v377
    %v380 = vmul.f32 %v378, %v378
    %v381 = vmul.f32 %v380, -0.001358992
    %v382 = vadd.f32 %v381, 0.041655596
    %v383 = vmul.f32 %v380, %v382
    %v384 = vadd.f32 %v383, -0.4999988
    %v385 = vmul.f32 %v380, %v384
    %v386 = vadd.f32 1.0, %v385
    %v387 = vmul.f32 %v378, %v378
    %v388 = vmul.f32 %v387, -0.00019511016
    %v389 = vadd.f32 %v388, 0.008332121
    %v390 = vmul.f32 %v387, %v389
    %v391 = vadd.f32 %v390, -0.16666654
    %v392 = vmul.f32 %v387, %v391
    %v393 = vadd.f32 %v392, 1.0
    %v394 = vmul.f32 %v393, %v378
    %vm395 = vweird.f32 %v94
    %v396 = vand.u32 %v379, 3
    %vm397 = vcmp.lt.s32.totalorder %v396, 2
    %vm398 = vcmp.eq.s32.totalorder %v396, 0
    %v399 = vxor.u32 %v394, 2147483648
    %v400 = vsel %vm398, %v386, %v399
    %vm401 = vcmp.eq.s32.totalorder %v396, 2
    %v402 = vxor.u32 %v386, 2147483648
    %v403 = vsel %vm401, %v402, %v394
    %v404 = vsel %vm397, %v400, %v403
    %v405 = vsel %vm395, nan, %v404
    %v406 = vsel %vm96, 1, 0
    %v407 = vperm.slane %v406, 0
    %vm408 = vcmp.eq.s32.totalorder %v407, 1
    %v409 = vsel %vm408, %v251, %v405
    %410 = vst [vmem:[#allocation8] sm:$0xff] %v409
    // Predicated region
    $region26: #{tpu_custom_call.1} parent=1 // pred_check
      _
    $region27: #{tpu_custom_call.1} parent=1 // pred_check_branch
      %412 = sbr.rel (0) target = $region29
    $region28: #{tpu_custom_call.1} parent=1 // pred_region
      %414 = vsyncadd [#allocation4], 96
      %s415 = sshll.u32 [#allocation8], 4
      %s416 = int_to_ptr.vmem [resolvable:$true] %s415
      %s417 = sshll.u32 %s3, 4
      %s418 = int_to_ptr.hbm [resolvable:$true] %s417
      %423 = dma.vmem_to_hbm [thread:$0]  %s416, 32, %s418, [#allocation4], 32, 32, 2
    $region29: #{tpu_custom_call.1} parent=1 // pred_fallthru
      _
    // Predicated region
    $region30: #{tpu_custom_call.1} parent=1 // pred_check
      _
    $region31: #{tpu_custom_call.1} parent=1 // pred_check_branch
      %425 = sbr.rel (0) target = $region33
    $region32: #{tpu_custom_call.1} parent=1 // pred_region
      %427 = dma.done [#allocation4], 128
    $region33: #{tpu_custom_call.1} parent=1 // pred_fallthru
      _
    %428 = vsyncpa [#allocation3], 1
    %429 = vsyncpa [#allocation6], 1
    %430 = vsyncpa [#allocation4], 1

</llo_original>
